<compile_context>
chip_gen: v7x
topology: tpu7x:2x2x1
jax: 0.10.0
libtpu: 0.0.40
codegen_flags: <defaults>
</compile_context>

<pallas_src>
import math

import jax
import jax.numpy as jnp
from jax.experimental import pallas as pl
from jax.experimental.pallas import tpu as pltpu


def _round_up(x, m):
    return (x + m - 1) // m * m


def _sublane(dtype):
    # Rows per packed sublane group: 8 for 32-bit, 16 for 16-bit, 32 for 8-bit dtypes.
    return max(8, 32 // jnp.dtype(dtype).itemsize)


def _nbytes(shape, dtype):
    return math.prod(shape) * jnp.dtype(dtype).itemsize


# ----------------------------------------------------------------------------------
# Kernel bodies
# ----------------------------------------------------------------------------------
def _make_full_kernel(scale, k_valid, kp, has_vlen, mxu_dtype):
    """Single-pass kernel (full padded key axis resident in VMEM).

    Used when the attention weights (B, Q, K) must be materialized.
    """

    def kernel(*refs):
        if has_vlen:
            vlen_ref, q_ref, k_ref, v_ref, o_ref, w_ref = refs
        else:
            q_ref, k_ref, v_ref, o_ref, w_ref = refs
            vlen_ref = None

        q = q_ref[0]          # (TQ, D)
        k = k_ref[0]          # (Kp, D)
        v = v_ref[0]          # (Kp, Dvp)

        # Fold 1/sqrt(d) into q (Q*D multiplies instead of Q*K).
        qs = q * jnp.asarray(scale, q.dtype)
        if mxu_dtype is not None:
            qs = qs.astype(mxu_dtype)
            k = k.astype(mxu_dtype)

        # scores: contraction over D expressed directly (no transpose / XLU pass).
        s = jax.lax.dot_general(qs, k, (((1,), (1,)), ((), ())),
                                preferred_element_type=jnp.float32)   # (TQ, Kp) f32

        # One merged mask select covers both the wrapper's key padding and valid_lens.
        # exp(-1e6 - m) underflows to exactly 0 in f32, matching the reference softmax.
        if has_vlen or k_valid < kp:
            col = jax.lax.broadcasted_iota(jnp.int32, s.shape, 1)
            if has_vlen:
                limit = jnp.minimum(vlen_ref[0], jnp.int32(k_valid))   # (TQ, 1)
            else:
                limit = jnp.int32(k_valid)
            s = jnp.where(col < limit, s, jnp.float32(-1.0e6))

        m = jnp.max(s, axis=-1, keepdims=True)
        e = jnp.exp(s - m)
        w = e / jnp.sum(e, axis=-1, keepdims=True)       # exact f32 normalization

        w_ref[0] = w.astype(w_ref.dtype)

        # dropout(p=0) is the identity -> weights @ V with an f32 accumulator.
        tgt = mxu_dtype if mxu_dtype is not None else v.dtype
        o = jnp.dot(w.astype(tgt), v.astype(tgt), preferred_element_type=jnp.float32)
        o_ref[0] = o.astype(o_ref.dtype)

    return kernel


def _make_flash_kernel(scale, k_valid, kp, has_vlen, mxu_dtype):
    """K-tiled kernel with online softmax (output-only fast path).

    VMEM footprint is O(TQ*TK + TQ*Dvp), independent of the full K extent.
    """

    def kernel(*refs):
        if has_vlen:
            vlen_ref, q_ref, k_ref, v_ref, o_ref, m_sc, l_sc, acc_sc = refs
        else:
            q_ref, k_ref, v_ref, o_ref, m_sc, l_sc, acc_sc = refs
            vlen_ref = None

        ki = pl.program_id(2)

        @pl.when(ki == 0)
        def _():
            m_sc[...] = jnp.full(m_sc.shape, -jnp.inf, jnp.float32)
            l_sc[...] = jnp.zeros(l_sc.shape, jnp.float32)
            acc_sc[...] = jnp.zeros(acc_sc.shape, jnp.float32)

        q = q_ref[0]          # (TQ, D)
        k = k_ref[0]          # (TK, D)
        v = v_ref[0]          # (TK, Dvp)

        qs = q * jnp.asarray(scale, q.dtype)
        if mxu_dtype is not None:
            qs = qs.astype(mxu_dtype)
            k = k.astype(mxu_dtype)

        s = jax.lax.dot_general(qs, k, (((1,), (1,)), ((), ())),
                                preferred_element_type=jnp.float32)   # (TQ, TK) f32
        tk = s.shape[-1]

        if has_vlen or k_valid < kp:
            col = jax.lax.broadcasted_iota(jnp.int32, s.shape, 1) + ki * tk
            if has_vlen:
                limit = jnp.minimum(vlen_ref[0], jnp.int32(k_valid))
            else:
                limit = jnp.int32(k_valid)
            s = jnp.where(col < limit, s, jnp.float32(-1.0e6))

        m_prev = m_sc[...]
        m_new = jnp.maximum(m_prev, jnp.max(s, axis=-1, keepdims=True))
        alpha = jnp.exp(m_prev - m_new)
        p = jnp.exp(s - m_new)
        l_sc[...] = alpha * l_sc[...] + jnp.sum(p, axis=-1, keepdims=True)

        tgt = mxu_dtype if mxu_dtype is not None else v.dtype
        acc_sc[...] = alpha * acc_sc[...] + jnp.dot(
            p.astype(tgt), v.astype(tgt), preferred_element_type=jnp.float32)
        m_sc[...] = m_new

        @pl.when(ki == pl.num_programs(2) - 1)
        def _():
            o_ref[0] = (acc_sc[...] / l_sc[...]).astype(o_ref.dtype)

    return kernel


# ----------------------------------------------------------------------------------
# Wrapper
# ----------------------------------------------------------------------------------
def dot_product_attention(queries, keys, values, valid_lens=None, dropout_p=0.0,
                          return_weights=True, mxu_dtype=None, weights_dtype=None,
                          crop_outputs=True):
    """Pallas implementation of DotProductAttention.forward (eval mode).

    queries: (B, Q, D), keys: (B, K, D), values: (B, K, Dv)
    valid_lens: None, (B,) int array, or (B, Q) int array (per-query), as in the reference.
    mxu_dtype: optional operand dtype for the matmuls (e.g. jnp.bfloat16 on v6e/v7x);
               softmax stays f32 and accumulation is f32.
    weights_dtype: storage dtype for the attention-weights output (e.g. bf16 to halve
                   the HBM writeback); defaults to the query dtype.
    Returns (output (B, Q, Dv), attention_weights (B, Q, K) or None).
    """
    del dropout_p  # TODO(synk): training-mode dropout not modeled (p=0 / eval identity).

    B, Q, D = queries.shape
    Bk, K, Dk = keys.shape
    Dv = values.shape[-1]
    assert Bk == B and Dk == D and values.shape[:2] == (B, K)

    out_dtype = queries.dtype
    w_dtype = out_dtype if weights_dtype is None else weights_dtype
    has_vlen = valid_lens is not None

    # ---- tiling / padding (lane-dense outputs, sublane-packed rows) -------------
    sub = _sublane(queries.dtype)
    Kp = _round_up(K, 128)
    Dvp = _round_up(Dv, 128)

    # K tile for the online-softmax (output-only) path.
    if Kp % 512 == 0:
        TK = 512
    elif Kp % 256 == 0:
        TK = 256
    else:
        TK = 128
    num_kt = Kp // TK

    # Tie TQ to the live f32 intermediate chain (scores/exp/weights) of the chosen path
    # so it stays well under a couple of MiB (avoids vreg spills / VMEM blowup).
    crit = Kp if return_weights else TK
    TQ = min(_round_up(Q, sub), 512)
    while TQ > sub and 3 * TQ * crit * 4 > (2 << 20):
        TQ = _round_up(TQ // 2, sub)
    Qp = _round_up(Q, TQ)
    num_qt = Qp // TQ
    # v7x megacore: prefer >= 2 iterations on the parallel grid axes.
    if B * num_qt < 2 and TQ > sub:
        TQ = _round_up(TQ // 2, sub)
        Qp = _round_up(Q, TQ)
        num_qt = Qp // TQ

    qp = queries if Qp == Q else jnp.pad(queries, ((0, 0), (0, Qp - Q), (0, 0)))
    kp_ = keys if Kp == K else jnp.pad(keys, ((0, 0), (0, Kp - K), (0, 0)))
    vp = values if (Kp == K and Dvp == Dv) else jnp.pad(
        values, ((0, 0), (0, Kp - K), (0, Dvp - Dv)))

    inputs = []
    if has_vlen:
        vl = jnp.asarray(valid_lens, dtype=jnp.int32)
        if vl.ndim == 1:
            vl = jnp.broadcast_to(vl[:, None], (B, Q))
        else:
            vl = vl.reshape(B, Q)
        if Qp != Q:
            vl = jnp.pad(vl, ((0, 0), (0, Qp - Q)), constant_values=K)
        vl = vl[:, :, None]                      # (B, Qp, 1) per-query lengths
        inputs.append(vl)
    inputs += [qp, kp_, vp]

    scale = 1.0 / math.sqrt(D)

    def _cparams(est_bytes, n_axes):
        sem = ("parallel", "parallel", "arbitrary")[:n_axes]
        kwargs = dict(dimension_semantics=sem)
        if est_bytes > (12 << 20):
            # Cap at 48 MiB: leaves headroom on v7x (64 MiB physical VMEM per TC).
            kwargs["vmem_limit_bytes"] = min(int(est_bytes * 3 // 2) + (8 << 20), 48 << 20)
        return pltpu.CompilerParams(**kwargs)

    # ---------------------------------------------------------------------------
    if return_weights:
        grid = (B, num_qt)
        in_specs = []
        if has_vlen:
            in_specs.append(pl.BlockSpec((1, TQ, 1), lambda b, qi: (b, qi, 0)))
        in_specs += [
            pl.BlockSpec((1, TQ, D), lambda b, qi: (b, qi, 0)),
            pl.BlockSpec((1, Kp, D), lambda b, qi: (b, 0, 0)),      # reused across Q tiles
            pl.BlockSpec((1, Kp, Dvp), lambda b, qi: (b, 0, 0)),
        ]
        out_specs = (pl.BlockSpec((1, TQ, Dvp), lambda b, qi: (b, qi, 0)),
                     pl.BlockSpec((1, TQ, Kp), lambda b, qi: (b, qi, 0)))
        out_shape = (jax.ShapeDtypeStruct((B, Qp, Dvp), out_dtype),
                     jax.ShapeDtypeStruct((B, Qp, Kp), w_dtype))

        est = 2 * (_nbytes((TQ, D), qp.dtype) + _nbytes((Kp, D), kp_.dtype)
                   + _nbytes((Kp, Dvp), vp.dtype) + _nbytes((TQ, Dvp), out_dtype)
                   + _nbytes((TQ, Kp), w_dtype))
        if has_vlen:
            est += 2 * _nbytes((TQ, 1), jnp.int32)
        est += 3 * TQ * Kp * 4   # live f32 scores/exp/weights chain

        kernel = _make_full_kernel(scale, K, Kp, has_vlen, mxu_dtype)
        out_p, w_p = pl.pallas_call(
            kernel, out_shape=out_shape, grid=grid,
            in_specs=in_specs, out_specs=out_specs,
            compiler_params=_cparams(est, 2),
        )(*inputs)
        if crop_outputs:
            # NOTE: when padding was applied this slice is an extra XLA copy; callers
            # that can consume the padded layout should pass crop_outputs=False.
            out_p = out_p[:, :Q, :Dv]
            w_p = w_p[:, :Q, :K]
        return out_p, w_p

    # --------------------------- output-only fast path ---------------------------
    grid = (B, num_qt, num_kt)
    in_specs = []
    if has_vlen:
        in_specs.append(pl.BlockSpec((1, TQ, 1), lambda b, qi, ki: (b, qi, 0)))
    in_specs += [
        pl.BlockSpec((1, TQ, D), lambda b, qi, ki: (b, qi, 0)),
        pl.BlockSpec((1, TK, D), lambda b, qi, ki: (b, ki, 0)),
        pl.BlockSpec((1, TK, Dvp), lambda b, qi, ki: (b, ki, 0)),
    ]
    out_specs = pl.BlockSpec((1, TQ, Dvp), lambda b, qi, ki: (b, qi, 0))
    out_shape = jax.ShapeDtypeStruct((B, Qp, Dvp), out_dtype)
    scratch_shapes = [pltpu.VMEM((TQ, 1), jnp.float32),     # running max
                      pltpu.VMEM((TQ, 1), jnp.float32),     # running denom
                      pltpu.VMEM((TQ, Dvp), jnp.float32)]   # running output acc

    est = 2 * (_nbytes((TQ, D), qp.dtype) + _nbytes((TK, D), kp_.dtype)
               + _nbytes((TK, Dvp), vp.dtype) + _nbytes((TQ, Dvp), out_dtype))
    if has_vlen:
        est += 2 * _nbytes((TQ, 1), jnp.int32)
    est += (TQ * (Dvp + 2)) * 4 + 3 * TQ * TK * 4

    kernel = _make_flash_kernel(scale, K, Kp, has_vlen, mxu_dtype)
    out_p = pl.pallas_call(
        kernel, out_shape=out_shape, grid=grid,
        in_specs=in_specs, out_specs=out_specs, scratch_shapes=scratch_shapes,
        compiler_params=_cparams(est, 3),
    )(*inputs)
    if crop_outputs:
        out_p = out_p[:, :Q, :Dv]
    return out_p, None


# ----------------------------------------------------------------------------------
# Pure-JAX reference (mirrors the PyTorch code; full-precision matmuls)
# ----------------------------------------------------------------------------------
def _reference(queries, keys, values, valid_lens):
    d = queries.shape[-1]
    hp = jax.lax.Precision.HIGHEST
    scores = jnp.einsum("bqd,bkd->bqk", queries, keys, precision=hp) / math.sqrt(d)
    if valid_lens is not None:
        vl = jnp.asarray(valid_lens)
        if vl.ndim == 1:
            vl = jnp.broadcast_to(vl[:, None], scores.shape[:2])
        col = jnp.arange(scores.shape[-1])[None, None, :]
        scores = jnp.where(col < vl[:, :, None], scores, -1.0e6)
    w = jax.nn.softmax(scores, axis=-1)
    return jnp.einsum("bqk,bkv->bqv", w, values, precision=hp), w


if __name__ == "__main__":
    key = jax.random.PRNGKey(0)
    kq, kk, kv = jax.random.split(key, 3)

    B, Q, K, D, Dv = 2, 8, 8, 32, 32
    queries = jax.random.normal(kq, (B, Q, D), dtype=jnp.float32)
    keys = jax.random.normal(kk, (B, K, D), dtype=jnp.float32)
    values = jax.random.normal(kv, (B, K, Dv), dtype=jnp.float32)
    valid_lens = jnp.array([3, 6], dtype=jnp.int32)

    tol = dict(atol=2e-2, rtol=2e-2)   # MXU matmul precision headroom

    # 1) 1-D (per-batch) valid_lens, weights materialized (single-pass kernel).
    out, attn_w = dot_product_attention(queries, keys, values, valid_lens)
    out, attn_w = jax.block_until_ready((out, attn_w))
    ref_out, ref_w = _reference(queries, keys, values, valid_lens)
    assert out.shape == (B, Q, Dv) and attn_w.shape == (B, Q, K)
    assert jnp.allclose(out, ref_out, **tol), "output mismatch (1-D lens)"
    assert jnp.allclose(attn_w, ref_w, **tol), "weights mismatch (1-D lens)"

    # 2) valid_lens=None, output-only fast path (K-tiled online-softmax kernel).
    out2, w2 = dot_product_attention(queries, keys, values, None, return_weights=False)
    out2 = jax.block_until_ready(out2)
    assert w2 is None
    ref_out2, _ = _reference(queries, keys, values, None)
    assert jnp.allclose(out2, ref_out2, **tol), "unmasked output mismatch"

    # 3) 2-D (per-query) valid_lens, weights materialized.
    vl2 = jnp.array([[1, 2, 3, 4, 5, 6, 7, 8],
                     [8, 7, 6, 5, 4, 3, 2, 1]], dtype=jnp.int32)
    out3, w3 = dot_product_attention(queries, keys, values, vl2)
    out3, w3 = jax.block_until_ready((out3, w3))
    ref_out3, ref_w3 = _reference(queries, keys, values, vl2)
    assert jnp.allclose(out3, ref_out3, **tol), "output mismatch (2-D lens)"
    assert jnp.allclose(w3, ref_w3, **tol), "weights mismatch (2-D lens)"

    # 4) Larger K exercising the multi-tile online softmax (output-only path).
    kq2, kk2, kv2 = jax.random.split(jax.random.PRNGKey(1), 3)
    q_big = jax.random.normal(kq2, (2, 16, 32), dtype=jnp.float32)
    k_big = jax.random.normal(kk2, (2, 300, 32), dtype=jnp.float32)
    v_big = jax.random.normal(kv2, (2, 300, 64), dtype=jnp.float32)
    vl_big = jnp.array([100, 250], dtype=jnp.int32)
    out4, _ = dot_product_attention(q_big, k_big, v_big, vl_big, return_weights=False)
    out4 = jax.block_until_ready(out4)
    ref_out4, _ = _reference(q_big, k_big, v_big, vl_big)
    assert jnp.allclose(out4, ref_out4, **tol), "output mismatch (large K, flash path)"

    # 5) bf16 MXU operands (v6e/v7x fast path); softmax stays f32 -> loose tolerance.
    out5, _ = dot_product_attention(queries, keys, values, valid_lens,
                                    return_weights=False, mxu_dtype=jnp.bfloat16)
    out5 = jax.block_until_ready(out5)
    assert jnp.allclose(out5, ref_out, atol=1e-1, rtol=1e-1), "bf16 MXU path mismatch"

    print("KERNEL_OK")
</pallas_src>

<mosaic_0001>
module attributes {stable_mosaic.version = 11 : i64} {
  func.func @kernel(%arg0: i32, %arg1: i32, %arg2: memref<1x8x1xi32, #tpu.memory_space<vmem>>, %arg3: memref<1x8x32xf32, #tpu.memory_space<vmem>>, %arg4: memref<1x128x32xf32, #tpu.memory_space<vmem>>, %arg5: memref<1x128x128xf32, #tpu.memory_space<vmem>>, %arg6: memref<1x8x128xf32, #tpu.memory_space<vmem>>, %arg7: memref<1x8x128xf32, #tpu.memory_space<vmem>>) attributes {dimension_semantics = [#tpu.dimension_semantics<parallel>, #tpu.dimension_semantics<parallel>], iteration_bounds = array<i64: 2, 1>, scalar_prefetch = 0 : i64, scratch_operands = 0 : i64, tpu.core_type = #tpu.core_type<tc>, window_params = [{transform_indices = @transform_0, window_bounds = array<i64: 1, 8, 1>}, {transform_indices = @transform_1, window_bounds = array<i64: 1, 8, 32>}, {transform_indices = @transform_2, window_bounds = array<i64: 1, 128, 32>}, {transform_indices = @transform_3, window_bounds = array<i64: 1, 128, 128>}, {transform_indices = @transform_4, window_bounds = array<i64: 1, 8, 128>}, {transform_indices = @transform_5, window_bounds = array<i64: 1, 8, 128>}]} {
    %c0 = arith.constant 0 : index
    %c0_0 = arith.constant 0 : index
    %c0_1 = arith.constant 0 : index
    %0 = vector.load %arg3[%c0, %c0_0, %c0_1] : memref<1x8x32xf32, #tpu.memory_space<vmem>>, vector<1x8x32xf32>
    %1 = vector.shape_cast %0 : vector<1x8x32xf32> to vector<8x32xf32>
    %c0_2 = arith.constant 0 : index
    %c0_3 = arith.constant 0 : index
    %c0_4 = arith.constant 0 : index
    %2 = vector.load %arg4[%c0_2, %c0_3, %c0_4] : memref<1x128x32xf32, #tpu.memory_space<vmem>>, vector<1x128x32xf32>
    %3 = vector.shape_cast %2 : vector<1x128x32xf32> to vector<128x32xf32>
    %c0_5 = arith.constant 0 : index
    %c0_6 = arith.constant 0 : index
    %c0_7 = arith.constant 0 : index
    %4 = vector.load %arg5[%c0_5, %c0_6, %c0_7] : memref<1x128x128xf32, #tpu.memory_space<vmem>>, vector<1x128x128xf32>
    %5 = vector.shape_cast %4 : vector<1x128x128xf32> to vector<128x128xf32>
    %cst = arith.constant 0.176776692 : f32
    %6 = vector.broadcast %cst : f32 to vector<8x32xf32>
    %7 = arith.mulf %1, %6 : vector<8x32xf32>
    %cst_8 = arith.constant dense<0.000000e+00> : vector<8x128xf32>
    %8 = tpu.matmul %7, %3, %cst_8 {dimension_numbers = #tpu.dot_dimension_numbers<[1], [1], [0], [0], [0, 0, 1, 0], [], []>} : vector<8x32xf32>, vector<128x32xf32>, vector<8x128xf32> -> vector<8x128xf32>
    %9 = tpu.iota {dimensions = array<i32: 1>} : vector<8x128xi32>
    %c0_9 = arith.constant 0 : index
    %c0_10 = arith.constant 0 : index
    %c0_11 = arith.constant 0 : index
    %10 = vector.load %arg2[%c0_9, %c0_10, %c0_11] : memref<1x8x1xi32, #tpu.memory_space<vmem>>, vector<1x8x1xi32>
    %11 = vector.shape_cast %10 : vector<1x8x1xi32> to vector<8x1xi32>
    %c8_i32 = arith.constant 8 : i32
    %12 = vector.broadcast %c8_i32 : i32 to vector<8x1xi32>
    %13 = arith.minsi %11, %12 : vector<8x1xi32>
    %14 = vector.broadcast %13 : vector<8x1xi32> to vector<8x128xi32>
    %15 = arith.cmpi slt, %9, %14 : vector<8x128xi32>
    %cst_12 = arith.constant -1.000000e+06 : f32
    %16 = vector.broadcast %cst_12 : f32 to vector<8x128xf32>
    %17 = arith.select %15, %8, %16 : vector<8x128xi1>, vector<8x128xf32>
    %cst_13 = arith.constant dense<0xFF800000> : vector<8xf32>
    %18 = vector.multi_reduction <maximumf>, %17, %cst_13 [1] : vector<8x128xf32> to vector<8xf32>
    %19 = vector.shape_cast %18 : vector<8xf32> to vector<8x1xf32>
    %20 = vector.broadcast %19 : vector<8x1xf32> to vector<8x128xf32>
    %21 = arith.subf %17, %20 : vector<8x128xf32>
    %22 = math.exp %21 : vector<8x128xf32>
    %cst_14 = arith.constant dense<0.000000e+00> : vector<8xf32>
    %23 = vector.multi_reduction <add>, %22, %cst_14 [1] : vector<8x128xf32> to vector<8xf32>
    %24 = vector.shape_cast %23 : vector<8xf32> to vector<8x1xf32>
    %25 = vector.broadcast %24 : vector<8x1xf32> to vector<8x128xf32>
    %26 = arith.divf %22, %25 : vector<8x128xf32>
    %c0_15 = arith.constant 0 : index
    %c0_16 = arith.constant 0 : index
    %c0_17 = arith.constant 0 : index
    %27 = vector.load %arg7[%c0_15, %c0_16, %c0_17] : memref<1x8x128xf32, #tpu.memory_space<vmem>>, vector<1x8x128xf32>
    %28 = vector.shape_cast %27 : vector<1x8x128xf32> to vector<8x128xf32>
    %29 = vector.shape_cast %26 : vector<8x128xf32> to vector<1x8x128xf32>
    tpu.vector_store %arg7[%c0_15, %c0_16, %c0_17], %29 {strides = array<i32>} : memref<1x8x128xf32, #tpu.memory_space<vmem>>, vector<1x8x128xf32>,
    %cst_18 = arith.constant dense<0.000000e+00> : vector<8x128xf32>
    %30 = tpu.matmul %26, %5, %cst_18 {dimension_numbers = #tpu.dot_dimension_numbers<[1], [0], [0], [1], [0, 0, 1, 1], [], []>} : vector<8x128xf32>, vector<128x128xf32>, vector<8x128xf32> -> vector<8x128xf32>
    %c0_19 = arith.constant 0 : index
    %c0_20 = arith.constant 0 : index
    %c0_21 = arith.constant 0 : index
    %31 = vector.load %arg6[%c0_19, %c0_20, %c0_21] : memref<1x8x128xf32, #tpu.memory_space<vmem>>, vector<1x8x128xf32>
    %32 = vector.shape_cast %31 : vector<1x8x128xf32> to vector<8x128xf32>
    %33 = vector.shape_cast %30 : vector<8x128xf32> to vector<1x8x128xf32>
    tpu.vector_store %arg6[%c0_19, %c0_20, %c0_21], %33 {strides = array<i32>} : memref<1x8x128xf32, #tpu.memory_space<vmem>>, vector<1x8x128xf32>,
    return
  }
  func.func @transform_0(%arg0: i32, %arg1: i32) -> (i32, i32, i32) {
    %c0_i32 = arith.constant 0 : i32
    %c0_i32_0 = arith.constant 0 : i32
    return %arg0, %arg1, %c0_i32 : i32, i32, i32
  }
  func.func @transform_1(%arg0: i32, %arg1: i32) -> (i32, i32, i32) {
    %c0_i32 = arith.constant 0 : i32
    %c0_i32_0 = arith.constant 0 : i32
    return %arg0, %arg1, %c0_i32 : i32, i32, i32
  }
  func.func @transform_2(%arg0: i32, %arg1: i32) -> (i32, i32, i32) {
    %c0_i32 = arith.constant 0 : i32
    %c0_i32_0 = arith.constant 0 : i32
    %c0_i32_1 = arith.constant 0 : i32
    return %arg0, %c0_i32, %c0_i32_0 : i32, i32, i32
  }
  func.func @transform_3(%arg0: i32, %arg1: i32) -> (i32, i32, i32) {
    %c0_i32 = arith.constant 0 : i32
    %c0_i32_0 = arith.constant 0 : i32
    %c0_i32_1 = arith.constant 0 : i32
    return %arg0, %c0_i32, %c0_i32_0 : i32, i32, i32
  }
  func.func @transform_4(%arg0: i32, %arg1: i32) -> (i32, i32, i32) {
    %c0_i32 = arith.constant 0 : i32
    %c0_i32_0 = arith.constant 0 : i32
    return %arg0, %arg1, %c0_i32 : i32, i32, i32
  }
  func.func @transform_5(%arg0: i32, %arg1: i32) -> (i32, i32, i32) {
    %c0_i32 = arith.constant 0 : i32
    %c0_i32_0 = arith.constant 0 : i32
    return %arg0, %arg1, %c0_i32 : i32, i32, i32
  }
}

</mosaic_0001>

<llo_original>
// kernel: tpu_custom_call.1
$region0: #{tpu_custom_call.1}
  #allocation0 [shape = 'u32[]', space=smem, size = 0x4, offset = 0x4, fixed_abs, tag = 'smem constant byte address 0x4 - core index']
  #allocation1 [shape = 'u32[144,128]{1,0:T(1,128)}', space=vmem, size = 0x12000, scoped, tag = 'internal scratch']
  %s0 = inlined_call_operand.vmem [shape: s32[2,8,1], index: 0, kind: input, shape index: {}]
  %s1 = inlined_call_operand.vmem [shape: f32[2,8,32], index: 1, kind: input, shape index: {}]
  %s2 = inlined_call_operand.vmem [shape: f32[2,128,32], index: 2, kind: input, shape index: {}]
  %s3 = inlined_call_operand.vmem [shape: f32[2,128,128], index: 3, kind: input, shape index: {}]
  %s4 = inlined_call_operand.hbm [shape: f32[2,8,128], index: 4, kind: output, shape index: {0}]
  %s5 = inlined_call_operand.hbm [shape: f32[2,8,128], index: 5, kind: output, shape index: {1}]
  %6 = xla_tuple %s4, %s5
  %s7 = sld [smem:[#allocation0]]
  $region57: #{tpu_custom_call.1} parent=0
    _
  %s9 = ssub.s32 1, %s7
  %s10 = scalar_select 0, %s9, %s7
  $region1: #{tpu_custom_call.1} parent=0
    #allocation2 [shape = 'u8[8192]{0}', space=vmem, size = 0x2000, scoped, tag = 'output window, operand 0']
    #allocation3 [shape = 's32[2]{0}', space=sflag, size = 0x8, scoped, tag = 'scoped memory for tpu_custom_call.1']
    #allocation4 [shape = 'u8[8192]{0}', space=vmem, size = 0x2000, scoped, tag = 'output window, operand 1']
    #allocation5 [shape = 's32[2]{0}', space=sflag, size = 0x8, scoped, tag = 'scoped memory for tpu_custom_call.1']
    %11 = vsyncpa [#allocation3], 0
    %s12 = scalar_lea.sflag [#allocation3], 1
    %13 = vsyncpa %s12, 0
    %14 = vsyncpa [#allocation5], 0
    %s15 = scalar_lea.sflag [#allocation5], 1
    %16 = vsyncpa %s15, 0
    loop: start=0, step=1, limit=4
    $region2: #{tpu_custom_call.1} parent=1 // loop_pre_header
      _
    $region3: #{tpu_custom_call.1} parent=1 // loop_header
      %s18 = sphi 0, %s22
      %p19 = scmp.ge.s32.totalorder %s18, 4
      %s25 = sphi 0, %s37
      %s26 = sphi 0, %s33
      %s27 = sphi 0, %s25
      %s28 = sphi 0, %s26
      %s29 = sphi 0, %s27
      %s30 = sphi 0, %s28
      %s42 = sphi 0, %s44
      %s45 = sphi 0, %s42
      %s46 = sphi 0, %s45
      %s62 = sphi 0, %s46
      %s70 = sphi 0, %s72
      %s73 = sphi 0, %s70
      %s74 = sphi 0, %s73
      %s90 = sphi 0, %s74
      %s96 = sphi 0, %s98
      %s99 = sphi 0, %s96
      %s100 = sphi 0, %s99
      %s116 = sphi 0, %s100
      %s122 = sphi 0, %s124
      %s125 = sphi 0, %s122
      %s126 = sphi 0, %s125
      %s142 = sphi 0, %s126
      %s150 = sphi 0, %s152
      %s153 = sphi 0, %s150
      %s154 = sphi 0, %s153
      %s170 = sphi 0, %s154
      %s178 = sphi 0, %s180
      %s181 = sphi 0, %s178
      %s182 = sphi 0, %s181
      %s198 = sphi 0, %s182
    $region4: #{tpu_custom_call.1} parent=1 // loop_header_branch
      %21 = sbr.rel (%p19) target = $region8
    $region5: #{tpu_custom_call.1} parent=1 // loop_body
      %s23 = ssub.s32 %s18, 1
      %s24 = ssub.s32 %s18, 2
      %s31 = sadd.s32 1, %s26
      %p32 = scmp.ge.s32.totalorder %s31, 1
      %s33 = scalar_select %p32, 0, %s31
      %s34 = sadd.s32 1, %s25
      %s35 = scalar_select %p32, %s34, %s25
      %p36 = scmp.ge.s32.totalorder %s35, 2
      %s37 = scalar_select %p36, 0, %s35
      %s38 = ssub.s32 %s25, %s37
      %s39 = ssub.s32 %s26, %s33
      %s40 = sor.u32 %s38, %s39
      %p41 = scmp.eq.s32.totalorder %s40, 0
      %s43 = sadd.s32 %s42, 1
      %s44 = scalar_select %p41, %s42, %s43
      %p47 = pneg %p41
      %p48 = scmp.eq.s32.totalorder %s18, 1
      %p49 = por %p47, %p48
      %p50 = scmp.ne.s32.totalorder %s42, %s45
      %p51 = scmp.eq.s32.totalorder %s18, 0
      %p52 = por %p50, %p51
      %p53 = scmp.ne.s32.totalorder %s42, %s45
      %p54 = scmp.eq.s32.totalorder %s23, 1
      %p55 = por %p53, %p54
      %p56 = scmp.ne.s32.totalorder %s45, %s46
      %p57 = scmp.eq.s32.totalorder %s23, 0
      %p58 = por %p56, %p57
      %p59 = scmp.ne.s32.totalorder %s45, %s46
      %p60 = scmp.eq.s32.totalorder %s24, 1
      %p61 = por %p59, %p60
      %p63 = scmp.ne.s32.totalorder %s46, %s62
      %p64 = scmp.eq.s32.totalorder %s24, 0
      %p65 = por %p63, %p64
      %s66 = ssub.s32 %s25, %s37
      %s67 = ssub.s32 %s26, %s33
      %s68 = sor.u32 %s66, %s67
      %p69 = scmp.eq.s32.totalorder %s68, 0
      %s71 = sadd.s32 %s70, 1
      %s72 = scalar_select %p69, %s70, %s71
      %p75 = pneg %p69
      %p76 = scmp.eq.s32.totalorder %s18, 1
      %p77 = por %p75, %p76
      %p78 = scmp.ne.s32.totalorder %s70, %s73
      %p79 = scmp.eq.s32.totalorder %s18, 0
      %p80 = por %p78, %p79
      %p81 = scmp.ne.s32.totalorder %s70, %s73
      %p82 = scmp.eq.s32.totalorder %s23, 1
      %p83 = por %p81, %p82
      %p84 = scmp.ne.s32.totalorder %s73, %s74
      %p85 = scmp.eq.s32.totalorder %s23, 0
      %p86 = por %p84, %p85
      %p87 = scmp.ne.s32.totalorder %s73, %s74
      %p88 = scmp.eq.s32.totalorder %s24, 1
      %p89 = por %p87, %p88
      %p91 = scmp.ne.s32.totalorder %s74, %s90
      %p92 = scmp.eq.s32.totalorder %s24, 0
      %p93 = por %p91, %p92
      %s94 = ssub.s32 %s25, %s37
      %p95 = scmp.eq.s32.totalorder %s94, 0
      %s97 = sadd.s32 %s96, 1
      %s98 = scalar_select %p95, %s96, %s97
      %p101 = pneg %p95
      %p102 = scmp.eq.s32.totalorder %s18, 1
      %p103 = por %p101, %p102
      %p104 = scmp.ne.s32.totalorder %s96, %s99
      %p105 = scmp.eq.s32.totalorder %s18, 0
      %p106 = por %p104, %p105
      %p107 = scmp.ne.s32.totalorder %s96, %s99
      %p108 = scmp.eq.s32.totalorder %s23, 1
      %p109 = por %p107, %p108
      %p110 = scmp.ne.s32.totalorder %s99, %s100
      %p111 = scmp.eq.s32.totalorder %s23, 0
      %p112 = por %p110, %p111
      %p113 = scmp.ne.s32.totalorder %s99, %s100
      %p114 = scmp.eq.s32.totalorder %s24, 1
      %p115 = por %p113, %p114
      %p117 = scmp.ne.s32.totalorder %s100, %s116
      %p118 = scmp.eq.s32.totalorder %s24, 0
      %p119 = por %p117, %p118
      %s120 = ssub.s32 %s25, %s37
      %p121 = scmp.eq.s32.totalorder %s120, 0
      %s123 = sadd.s32 %s122, 1
      %s124 = scalar_select %p121, %s122, %s123
      %p127 = pneg %p121
      %p128 = scmp.eq.s32.totalorder %s18, 1
      %p129 = por %p127, %p128
      %p130 = scmp.ne.s32.totalorder %s122, %s125
      %p131 = scmp.eq.s32.totalorder %s18, 0
      %p132 = por %p130, %p131
      %p133 = scmp.ne.s32.totalorder %s122, %s125
      %p134 = scmp.eq.s32.totalorder %s23, 1
      %p135 = por %p133, %p134
      %p136 = scmp.ne.s32.totalorder %s125, %s126
      %p137 = scmp.eq.s32.totalorder %s23, 0
      %p138 = por %p136, %p137
      %p139 = scmp.ne.s32.totalorder %s125, %s126
      %p140 = scmp.eq.s32.totalorder %s24, 1
      %p141 = por %p139, %p140
      %p143 = scmp.ne.s32.totalorder %s126, %s142
      %p144 = scmp.eq.s32.totalorder %s24, 0
      %p145 = por %p143, %p144
      %s146 = ssub.s32 %s25, %s37
      %s147 = ssub.s32 %s26, %s33
      %s148 = sor.u32 %s146, %s147
      %p149 = scmp.eq.s32.totalorder %s148, 0
      %s151 = sadd.s32 %s150, 1
      %s152 = scalar_select %p149, %s150, %s151
      %p155 = pneg %p149
      %p156 = scmp.eq.s32.totalorder %s18, 1
      %p157 = por %p155, %p156
      %p158 = scmp.ne.s32.totalorder %s150, %s153
      %p159 = scmp.eq.s32.totalorder %s18, 0
      %p160 = por %p158, %p159
      %p161 = scmp.ne.s32.totalorder %s150, %s153
      %p162 = scmp.eq.s32.totalorder %s23, 1
      %p163 = por %p161, %p162
      %p164 = scmp.ne.s32.totalorder %s153, %s154
      %p165 = scmp.eq.s32.totalorder %s23, 0
      %p166 = por %p164, %p165
      %p167 = scmp.ne.s32.totalorder %s153, %s154
      %p168 = scmp.eq.s32.totalorder %s24, 1
      %p169 = por %p167, %p168
      %p171 = scmp.ne.s32.totalorder %s154, %s170
      %p172 = scmp.eq.s32.totalorder %s24, 0
      %p173 = por %p171, %p172
      %s174 = ssub.s32 %s25, %s37
      %s175 = ssub.s32 %s26, %s33
      %s176 = sor.u32 %s174, %s175
      %p177 = scmp.eq.s32.totalorder %s176, 0
      %s179 = sadd.s32 %s178, 1
      %s180 = scalar_select %p177, %s178, %s179
      %p183 = pneg %p177
      %p184 = scmp.eq.s32.totalorder %s18, 1
      %p185 = por %p183, %p184
      %p186 = scmp.ne.s32.totalorder %s178, %s181
      %p187 = scmp.eq.s32.totalorder %s18, 0
      %p188 = por %p186, %p187
      %p189 = scmp.ne.s32.totalorder %s178, %s181
      %p190 = scmp.eq.s32.totalorder %s23, 1
      %p191 = por %p189, %p190
      %p192 = scmp.ne.s32.totalorder %s181, %s182
      %p193 = scmp.eq.s32.totalorder %s23, 0
      %p194 = por %p192, %p193
      %p195 = scmp.ne.s32.totalorder %s181, %s182
      %p196 = scmp.eq.s32.totalorder %s24, 1
      %p197 = por %p195, %p196
      %p199 = scmp.ne.s32.totalorder %s182, %s198
      %p200 = scmp.eq.s32.totalorder %s24, 0
      %p201 = por %p199, %p200
      %p202 = scmp.le.s32.totalorder 1, %s18
      %p203 = scmp.lt.s32.totalorder %s18, 3
      %p204 = pnand %p202, %p203
      %p205 = pneg %p204
      // Predicated region
      $region9: #{tpu_custom_call.1} parent=5 // pred_check
        _
      $region10: #{tpu_custom_call.1} parent=5 // pred_check_branch
        %207 = sbr.rel (%p204) target = $region12
      $region11: #{tpu_custom_call.1} parent=5 // pred_region
        %s208 = ssub.s32 %s18, 1
      $region12: #{tpu_custom_call.1} parent=5 // pred_fallthru
        _
      %p209 = scmp.lt.s32.totalorder %s18, 2
      // Predicated region
      $region13: #{tpu_custom_call.1} parent=5 // pred_check
        %p210 = pneg %p209
      $region14: #{tpu_custom_call.1} parent=5 // pred_check_branch
        %212 = sbr.rel (%p210) target = $region16
      $region15: #{tpu_custom_call.1} parent=5 // pred_region
        // Predicated region
        $region17: #{tpu_custom_call.1} parent=15 // pred_check
          %p213 = pneg %p52
        $region18: #{tpu_custom_call.1} parent=15 // pred_check_branch
          %215 = sbr.rel (%p213) target = $region20
        $region19: #{tpu_custom_call.1} parent=15 // pred_region
          %p216 = scmp.lt.s32.totalorder %s25, 1
          %s217 = scalar_select %p216, %s25, 1
          %p218 = scmp.lt.s32.totalorder %s26, 0
          %s219 = scalar_select %p218, %s26, 0
          %s220 = sadd.s32 %s219, %s217
          %s221 = smul.addr %s220, 8
          %s222 = scalar_lea.vmem %s0, %s221
        $region20: #{tpu_custom_call.1} parent=15 // pred_fallthru
          _
        // Predicated region
        $region21: #{tpu_custom_call.1} parent=15 // pred_check
          %p223 = pneg %p80
        $region22: #{tpu_custom_call.1} parent=15 // pred_check_branch
          %225 = sbr.rel (%p223) target = $region24
        $region23: #{tpu_custom_call.1} parent=15 // pred_region
          %p226 = scmp.lt.s32.totalorder %s25, 1
          %s227 = scalar_select %p226, %s25, 1
          %p228 = scmp.lt.s32.totalorder %s26, 0
          %s229 = scalar_select %p228, %s26, 0
          %s230 = sadd.s32 %s229, %s227
          %s231 = smul.addr %s230, 8
          %s232 = scalar_lea.vmem %s1, %s231
        $region24: #{tpu_custom_call.1} parent=15 // pred_fallthru
          _
        // Predicated region
        $region25: #{tpu_custom_call.1} parent=15 // pred_check
          %p233 = pneg %p106
        $region26: #{tpu_custom_call.1} parent=15 // pred_check_branch
          %235 = sbr.rel (%p233) target = $region28
        $region27: #{tpu_custom_call.1} parent=15 // pred_region
          %p236 = scmp.lt.s32.totalorder %s25, 1
          %s237 = scalar_select %p236, %s25, 1
          %s238 = smul.addr %s237, 16
          %s239 = smul.addr %s238, 8
          %s240 = scalar_lea.vmem %s2, %s239
        $region28: #{tpu_custom_call.1} parent=15 // pred_fallthru
          _
        // Predicated region
        $region29: #{tpu_custom_call.1} parent=15 // pred_check
          %p241 = pneg %p132
        $region30: #{tpu_custom_call.1} parent=15 // pred_check_branch
          %243 = sbr.rel (%p241) target = $region32
        $region31: #{tpu_custom_call.1} parent=15 // pred_region
          %p244 = scmp.lt.s32.totalorder %s25, 1
          %s245 = scalar_select %p244, %s25, 1
          %s246 = smul.addr %s245, 16
          %s247 = smul.addr %s246, 8
          %s248 = scalar_lea.vmem %s3, %s247
        $region32: #{tpu_custom_call.1} parent=15 // pred_fallthru
          _
      $region16: #{tpu_custom_call.1} parent=5 // pred_fallthru
        _
      %p249 = scmp.le.s32.totalorder 1, %s18
      %p250 = scmp.lt.s32.totalorder %s18, 3
      %p251 = pnand %p249, %p250
      %p252 = pneg %p251
      // Predicated region
      $region33: #{tpu_custom_call.1} parent=5 // pred_check
        _
      $region34: #{tpu_custom_call.1} parent=5 // pred_check_branch
        %254 = sbr.rel (%p251) target = $region36
      $region35: #{tpu_custom_call.1} parent=5 // pred_region
        %s255 = ssub.s32 %s18, 1
        %p256 = scmp.lt.s32.totalorder %s27, 1
        %s257 = scalar_select %p256, %s27, 1
        %p258 = scmp.lt.s32.totalorder %s28, 0
        %s259 = scalar_select %p258, %s28, 0
        %s260 = sadd.s32 %s259, %s257
        %s261 = smul.addr %s260, 8
        %s262 = scalar_lea.vmem %s0, %s261
        %p263 = pneg %p58
        %p264 = pneg %p55
        %p265 = scmp.lt.s32.totalorder %s27, 1
        %s266 = scalar_select %p265, %s27, 1
        %p267 = scmp.lt.s32.totalorder %s28, 0
        %s268 = scalar_select %p267, %s28, 0
        %s269 = sadd.s32 %s268, %s266
        %s270 = smul.addr %s269, 8
        %s271 = scalar_lea.vmem %s1, %s270
        %p272 = pneg %p86
        %p273 = pneg %p83
        %p274 = scmp.lt.s32.totalorder %s27, 1
        %s275 = scalar_select %p274, %s27, 1
        %s276 = smul.addr %s275, 16
        %s277 = smul.addr %s276, 8
        %s278 = scalar_lea.vmem %s2, %s277
        %p279 = pneg %p112
        %p280 = pneg %p109
        %p281 = scmp.lt.s32.totalorder %s27, 1
        %s282 = scalar_select %p281, %s27, 1
        %s283 = smul.addr %s282, 16
        %s284 = smul.addr %s283, 8
        %s285 = scalar_lea.vmem %s3, %s284
        %p286 = pneg %p138
        %p287 = pneg %p135
        %p288 = pneg %p166
        %p289 = pneg %p163
        %s290 = sand.u32 %s153, 1
        %s291 = scalar_lea.sflag [#allocation3], %s290
        %s292 = sand.u32 %s153, 1
        %s293 = smul.addr %s292, 8
        %s294 = scalar_lea.vmem [#allocation2], %s293
        %p295 = pneg %p194
        %p296 = pneg %p191
        %s297 = sand.u32 %s181, 1
        %s298 = scalar_lea.sflag [#allocation5], %s297
        %s299 = sand.u32 %s181, 1
        %s300 = smul.addr %s299, 8
        %s301 = scalar_lea.vmem [#allocation4], %s300
        %p302 = scmp.lt.s32.totalorder %s27, 1
        %s303 = scalar_select %p302, %s27, 1
        %p304 = scmp.lt.s32.totalorder %s28, 0
        %s305 = scalar_select %p304, %s28, 0
        %s306 = sadd.s32 %s305, %s303
        %s307 = smul.addr %s306, 8
        %s308 = scalar_lea.vmem %s0, %s307
        %p309 = scmp.lt.s32.totalorder %s27, 1
        %s310 = scalar_select %p309, %s27, 1
        %p311 = scmp.lt.s32.totalorder %s28, 0
        %s312 = scalar_select %p311, %s28, 0
        %s313 = sadd.s32 %s312, %s310
        %s314 = smul.addr %s313, 8
        %s315 = scalar_lea.vmem %s1, %s314
        %p316 = scmp.lt.s32.totalorder %s27, 1
        %s317 = scalar_select %p316, %s27, 1
        %s318 = smul.addr %s317, 16
        %s319 = smul.addr %s318, 8
        %s320 = scalar_lea.vmem %s2, %s319
        %p321 = scmp.lt.s32.totalorder %s27, 1
        %s322 = scalar_select %p321, %s27, 1
        %s323 = smul.addr %s322, 16
        %s324 = smul.addr %s323, 8
        %s325 = scalar_lea.vmem %s3, %s324
        %v326 = vld [vmem:[%s315] sm:$0xff]
        %v327 = vld [vmem:[%s320] sm:$0xff]
        %v328 = vld [vmem:[%s320 + $0x8] sm:$0xff]
        %v329 = vld [vmem:[%s320 + $0x10] sm:$0xff]
        %v330 = vld [vmem:[%s320 + $0x18] sm:$0xff]
        %v331 = vld [vmem:[%s320 + $0x20] sm:$0xff]
        %v332 = vld [vmem:[%s320 + $0x28] sm:$0xff]
        %v333 = vld [vmem:[%s320 + $0x30] sm:$0xff]
        %v334 = vld [vmem:[%s320 + $0x38] sm:$0xff]
        %v335 = vld [vmem:[%s320 + $0x40] sm:$0xff]
        %v336 = vld [vmem:[%s320 + $0x48] sm:$0xff]
        %v337 = vld [vmem:[%s320 + $0x50] sm:$0xff]
        %v338 = vld [vmem:[%s320 + $0x58] sm:$0xff]
        %v339 = vld [vmem:[%s320 + $0x60] sm:$0xff]
        %v340 = vld [vmem:[%s320 + $0x68] sm:$0xff]
        %v341 = vld [vmem:[%s320 + $0x70] sm:$0xff]
        %v342 = vld [vmem:[%s320 + $0x78] sm:$0xff]
        %v343 = vld [vmem:[%s325] sm:$0xff]
        %v344 = vld [vmem:[%s325 + $0x8] sm:$0xff]
        %v345 = vld [vmem:[%s325 + $0x10] sm:$0xff]
        %v346 = vld [vmem:[%s325 + $0x18] sm:$0xff]
        %v347 = vld [vmem:[%s325 + $0x20] sm:$0xff]
        %v348 = vld [vmem:[%s325 + $0x28] sm:$0xff]
        %v349 = vld [vmem:[%s325 + $0x30] sm:$0xff]
        %v350 = vld [vmem:[%s325 + $0x38] sm:$0xff]
        %v351 = vld [vmem:[%s325 + $0x40] sm:$0xff]
        %v352 = vld [vmem:[%s325 + $0x48] sm:$0xff]
        %v353 = vld [vmem:[%s325 + $0x50] sm:$0xff]
        %v354 = vld [vmem:[%s325 + $0x58] sm:$0xff]
        %v355 = vld [vmem:[%s325 + $0x60] sm:$0xff]
        %v356 = vld [vmem:[%s325 + $0x68] sm:$0xff]
        %v357 = vld [vmem:[%s325 + $0x70] sm:$0xff]
        %v358 = vld [vmem:[%s325 + $0x78] sm:$0xff]
        %v359 = vmul.f32 %v326, 0.17677669
        %vm360 = vcmask 261120
        %v362 = vsel %vm360, %v359, 0
        %v365 = vsel %vm360, %v327, 0
        %v368 = vsel %vm360, %v328, 0
        %v371 = vsel %vm360, %v329, 0
        %v374 = vsel %vm360, %v330, 0
        %v377 = vsel %vm360, %v331, 0
        %v380 = vsel %vm360, %v332, 0
        %v383 = vsel %vm360, %v333, 0
        %v386 = vsel %vm360, %v334, 0
        %v389 = vsel %vm360, %v335, 0
        %v392 = vsel %vm360, %v336, 0
        %v395 = vsel %vm360, %v337, 0
        %v398 = vsel %vm360, %v338, 0
        %v401 = vsel %vm360, %v339, 0
        %v404 = vsel %vm360, %v340, 0
        %v407 = vsel %vm360, %v341, 0
        %v410 = vsel %vm360, %v342, 0
        %412 = vmatprep.subr.mxu0 0.0
        %413 = vmatpush1.xpose.msra.mxu0 %v365
        %414 = vmatprep.subr.mxu0 0.0
        %415 = vmatpush1.xpose.msra.mxu0 %v368
        %416 = vmatprep.subr.mxu0 0.0
        %417 = vmatpush1.xpose.msra.mxu0 %v371
        %418 = vmatprep.subr.mxu0 0.0
        %419 = vmatpush1.xpose.msra.mxu0 %v374
        %420 = vmatprep.subr.mxu0 0.0
        %421 = vmatpush1.xpose.msra.mxu0 %v377
        %422 = vmatprep.subr.mxu0 0.0
        %423 = vmatpush1.xpose.msra.mxu0 %v380
        %424 = vmatprep.subr.mxu0 0.0
        %425 = vmatpush1.xpose.msra.mxu0 %v383
        %426 = vmatprep.subr.mxu0 0.0
        %427 = vmatpush1.xpose.msra.mxu0 %v386
        %428 = vmatprep.subr.mxu0 0.0
        %429 = vmatpush1.xpose.msra.mxu0 %v389
        %430 = vmatprep.subr.mxu0 0.0
        %431 = vmatpush1.xpose.msra.mxu0 %v392
        %432 = vmatprep.subr.mxu0 0.0
        %433 = vmatpush1.xpose.msra.mxu0 %v395
        %434 = vmatprep.subr.mxu0 0.0
        %435 = vmatpush1.xpose.msra.mxu0 %v398
        %436 = vmatprep.subr.mxu0 0.0
        %437 = vmatpush1.xpose.msra.mxu0 %v401
        %438 = vmatprep.subr.mxu0 0.0
        %439 = vmatpush1.xpose.msra.mxu0 %v404
        %440 = vmatprep.subr.mxu0 0.0
        %441 = vmatpush1.xpose.msra.mxu0 %v407
        %442 = vmatprep.subr.mxu0 0.0
        %443 = vmatpush1.xpose.msra.mxu0 %v410
        %444 = vmatprep.subr.mxu0 0.0
        %445 = vmatpush1.xpose.msra.mxu0 0.0
        %446 = vmatprep.subr.mxu0 0.0
        %447 = vmatpush1.xpose.msra.mxu0 0.0
        %448 = vmatprep.subr.mxu0 0.0
        %449 = vmatpush1.xpose.msra.mxu0 0.0
        %450 = vmatprep.subr.mxu0 0.0
        %451 = vmatpush1.xpose.msra.mxu0 0.0
        %452 = vmatprep.subr.mxu0 0.0
        %453 = vmatpush1.xpose.msra.mxu0 0.0
        %454 = vmatprep.subr.mxu0 0.0
        %455 = vmatpush1.xpose.msra.mxu0 0.0
        %456 = vmatprep.subr.mxu0 0.0
        %457 = vmatpush1.xpose.msra.mxu0 0.0
        %458 = vmatprep.subr.mxu0 0.0
        %459 = vmatpush1.xpose.msra.mxu0 0.0
        %460 = vmatprep.subr.mxu0 0.0
        %461 = vmatpush1.xpose.msra.mxu0 0.0
        %462 = vmatprep.subr.mxu0 0.0
        %463 = vmatpush1.xpose.msra.mxu0 0.0
        %464 = vmatprep.subr.mxu0 0.0
        %465 = vmatpush1.xpose.msra.mxu0 0.0
        %466 = vmatprep.subr.mxu0 0.0
        %467 = vmatpush1.xpose.msra.mxu0 0.0
        %468 = vmatprep.subr.mxu0 0.0
        %469 = vmatpush1.xpose.msra.mxu0 0.0
        %470 = vmatprep.subr.mxu0 0.0
        %471 = vmatpush1.xpose.msra.mxu0 0.0
        %472 = vmatprep.subr.mxu0 0.0
        %473 = vmatpush1.xpose.msra.mxu0 0.0
        %474 = vmatprep.subr.mxu0 0.0
        %475 = vmatpush1.xpose.msra.mxu0 0.0
        %476 = vmatprep.mubr.f32.mxu0 0.0
        %477 = vmatmul.mubr.f32.gmra.mrb[0].mxu0 %v362
        %v478 = vpop.f32.mrb[0].mxu0
        %v479 = vadd.f32 0.0, %v478
        %v480 = vpop.f32.mrb[0].mxu0
        %481 = vdwg.mxu0
        %v482 = vlaneseq
        %v483 = vand.u32 %v482, 127
        %v484 = vld [vmem:[%s308] sm:$0xff]
        %vm485 = vcmp.lt.s32.totalorder %v484, 8
        %v486 = vsel %vm485, %v484, 8
        %487 = vset.pattern.permute.xlu0 0
        %488 = vperm.xlu0 %487, %v486
        %v489 = vpop.permute.xlu0 %488
        %vm490 = vcmp.lt.s32.totalorder %v483, %v489
        %v491 = vsel %vm490, %v479, -1000000.0
        %492 = vmax.xlane.f32.xlu0 %v491
        %v493 = vpop.xlane.xlu0 %492
        %v494 = vsub.f32 %v491, %v493
        %v495 = vmul.f32 %v494, 1.442695
        %v496 = vpow.pop %v495
        %497 = vadd.xlane.f32.xlu0 %v496
        %v498 = vpop.xlane.xlu0 %497
        %v499 = vrcp.pop %v498
        %v500 = vmul.f32 %v496, %v499
        %501 = vst [vmem:[%s301] sm:$0xff] %v500
        %502 = vmatprep.subr.mxu0 0.0
        %503 = vmatpush1.msra.mxu0 %v343
        %504 = vmatprep.subr.mxu0 0.0
        %505 = vmatpush1.msra.mxu0 %v344
        %506 = vmatprep.subr.mxu0 0.0
        %507 = vmatpush1.msra.mxu0 %v345
        %508 = vmatprep.subr.mxu0 0.0
        %509 = vmatpush1.msra.mxu0 %v346
        %510 = vmatprep.subr.mxu0 0.0
        %511 = vmatpush1.msra.mxu0 %v347
        %512 = vmatprep.subr.mxu0 0.0
        %513 = vmatpush1.msra.mxu0 %v348
        %514 = vmatprep.subr.mxu0 0.0
        %515 = vmatpush1.msra.mxu0 %v349
        %516 = vmatprep.subr.mxu0 0.0
        %517 = vmatpush1.msra.mxu0 %v350
        %518 = vmatprep.subr.mxu0 0.0
        %519 = vmatpush1.msra.mxu0 %v351
        %520 = vmatprep.subr.mxu0 0.0
        %521 = vmatpush1.msra.mxu0 %v352
        %522 = vmatprep.subr.mxu0 0.0
        %523 = vmatpush1.msra.mxu0 %v353
        %524 = vmatprep.subr.mxu0 0.0
        %525 = vmatpush1.msra.mxu0 %v354
        %526 = vmatprep.subr.mxu0 0.0
        %527 = vmatpush1.msra.mxu0 %v355
        %528 = vmatprep.subr.mxu0 0.0
        %529 = vmatpush1.msra.mxu0 %v356
        %530 = vmatprep.subr.mxu0 0.0
        %531 = vmatpush1.msra.mxu0 %v357
        %532 = vmatprep.subr.mxu0 0.0
        %533 = vmatpush1.msra.mxu0 %v358
        %534 = vmatprep.subr.mxu0 0.0
        %535 = vmatpush1.msra.mxu0 0.0
        %536 = vmatprep.subr.mxu0 0.0
        %537 = vmatpush1.msra.mxu0 0.0
        %538 = vmatprep.subr.mxu0 0.0
        %539 = vmatpush1.msra.mxu0 0.0
        %540 = vmatprep.subr.mxu0 0.0
        %541 = vmatpush1.msra.mxu0 0.0
        %542 = vmatprep.subr.mxu0 0.0
        %543 = vmatpush1.msra.mxu0 0.0
        %544 = vmatprep.subr.mxu0 0.0
        %545 = vmatpush1.msra.mxu0 0.0
        %546 = vmatprep.subr.mxu0 0.0
        %547 = vmatpush1.msra.mxu0 0.0
        %548 = vmatprep.subr.mxu0 0.0
        %549 = vmatpush1.msra.mxu0 0.0
        %550 = vmatprep.subr.mxu0 0.0
        %551 = vmatpush1.msra.mxu0 0.0
        %552 = vmatprep.subr.mxu0 0.0
        %553 = vmatpush1.msra.mxu0 0.0
        %554 = vmatprep.subr.mxu0 0.0
        %555 = vmatpush1.msra.mxu0 0.0
        %556 = vmatprep.subr.mxu0 0.0
        %557 = vmatpush1.msra.mxu0 0.0
        %558 = vmatprep.subr.mxu0 0.0
        %559 = vmatpush1.msra.mxu0 0.0
        %560 = vmatprep.subr.mxu0 0.0
        %561 = vmatpush1.msra.mxu0 0.0
        %562 = vmatprep.subr.mxu0 0.0
        %563 = vmatpush1.msra.mxu0 0.0
        %564 = vmatprep.subr.mxu0 0.0
        %565 = vmatpush1.msra.mxu0 0.0
        %566 = vmatprep.mubr.f32.mxu0 0.0
        %567 = vmatmul.mubr.f32.gmra.mrb[0].mxu0 %v500
        %v568 = vpop.f32.mrb[0].mxu0
        %v569 = vadd.f32 0.0, %v568
        %v570 = vpop.f32.mrb[0].mxu0
        %571 = vdwg.mxu0
        %572 = vst [vmem:[%s294] sm:$0xff] %v569
        %s573 = sand.u32 %s153, 1
        %s574 = scalar_lea.sflag [#allocation3], %s573
        %s575 = sand.u32 %s153, 1
        %s576 = smul.addr %s575, 8
        %s577 = scalar_lea.vmem [#allocation2], %s576
        %s578 = sand.u32 %s181, 1
        %s579 = scalar_lea.sflag [#allocation5], %s578
        %s580 = sand.u32 %s181, 1
        %s581 = smul.addr %s580, 8
        %s582 = scalar_lea.vmem [#allocation4], %s581
        // Predicated region
        $region37: #{tpu_custom_call.1} parent=35 // pred_check
          %p583 = pneg %p163
        $region38: #{tpu_custom_call.1} parent=35 // pred_check_branch
          %585 = sbr.rel (%p583) target = $region40
        $region39: #{tpu_custom_call.1} parent=35 // pred_region
          %s587 = ssub.s32 128, 128
          %588 = vsyncadd %s574, %s587
          %s589 = sadd.s32 %s28, %s27
          %s590 = smul.addr %s589, 128
          %s591 = scalar_lea.hbm %s4, %s590
          %s593 = sshll.u32 %s577, 4
          %s594 = int_to_ptr.vmem [resolvable:$true] %s593
          %596 = dma.vmem_to_hbm [thread:$0]  %s594, 128, %s591, %s574
        $region40: #{tpu_custom_call.1} parent=35 // pred_fallthru
          _
        // Predicated region
        $region41: #{tpu_custom_call.1} parent=35 // pred_check
          %p597 = pneg %p191
        $region42: #{tpu_custom_call.1} parent=35 // pred_check_branch
          %599 = sbr.rel (%p597) target = $region44
        $region43: #{tpu_custom_call.1} parent=35 // pred_region
          %s601 = ssub.s32 128, 128
          %602 = vsyncadd %s579, %s601
          %s603 = sadd.s32 %s28, %s27
          %s604 = smul.addr %s603, 128
          %s605 = scalar_lea.hbm %s5, %s604
          %s607 = sshll.u32 %s582, 4
          %s608 = int_to_ptr.vmem [resolvable:$true] %s607
          %610 = dma.vmem_to_hbm [thread:$0]  %s608, 128, %s605, %s579
        $region44: #{tpu_custom_call.1} parent=35 // pred_fallthru
          _
      $region36: #{tpu_custom_call.1} parent=5 // pred_fallthru
        _
      %p611 = scmp.le.s32.totalorder 2, %s18
      // Predicated region
      $region45: #{tpu_custom_call.1} parent=5 // pred_check
        %p612 = pneg %p611
      $region46: #{tpu_custom_call.1} parent=5 // pred_check_branch
        %614 = sbr.rel (%p612) target = $region48
      $region47: #{tpu_custom_call.1} parent=5 // pred_region
        %s615 = ssub.s32 %s18, 2
        // Predicated region
        $region49: #{tpu_custom_call.1} parent=47 // pred_check
          %p616 = pneg %p169
        $region50: #{tpu_custom_call.1} parent=47 // pred_check_branch
          %618 = sbr.rel (%p616) target = $region52
        $region51: #{tpu_custom_call.1} parent=47 // pred_region
          %s619 = sand.u32 %s154, 1
          %s620 = scalar_lea.sflag [#allocation3], %s619
          %s621 = sand.u32 %s154, 1
          %s622 = smul.addr %s621, 8
          %s623 = scalar_lea.vmem [#allocation2], %s622
          %624 = dma.done %s620, 128
        $region52: #{tpu_custom_call.1} parent=47 // pred_fallthru
          _
        // Predicated region
        $region53: #{tpu_custom_call.1} parent=47 // pred_check
          %p625 = pneg %p197
        $region54: #{tpu_custom_call.1} parent=47 // pred_check_branch
          %627 = sbr.rel (%p625) target = $region56
        $region55: #{tpu_custom_call.1} parent=47 // pred_region
          %s628 = sand.u32 %s182, 1
          %s629 = scalar_lea.sflag [#allocation5], %s628
          %s630 = sand.u32 %s182, 1
          %s631 = smul.addr %s630, 8
          %s632 = scalar_lea.vmem [#allocation4], %s631
          %633 = dma.done %s629, 128
        $region56: #{tpu_custom_call.1} parent=47 // pred_fallthru
          _
      $region48: #{tpu_custom_call.1} parent=5 // pred_fallthru
        _
    $region6: #{tpu_custom_call.1} parent=1 // loop_footer
      %s22 = sadd.s32 1, %s18
    $region7: #{tpu_custom_call.1} parent=1 // loop_footer_branch
      %17 = sbr.rel target = $region3
    $region8: #{tpu_custom_call.1} parent=1 // loop_exit
      _
    %634 = vsyncpa [#allocation3], 1
    %s635 = scalar_lea.sflag [#allocation3], 1
    %636 = vsyncpa %s635, 1
    %637 = vsyncpa [#allocation5], 1
    %s638 = scalar_lea.sflag [#allocation5], 1
    %639 = vsyncpa %s638, 1

</llo_original>
